<compile_context>
chip_gen: v7x
topology: tpu7x:2x2x1
jax: 0.10.0
libtpu: 0.0.40
codegen_flags: <defaults>
</compile_context>

<pallas_src>
import jax
import jax.numpy as jnp
from jax.experimental import pallas as pl
from jax.experimental.pallas import tpu as pltpu


def _round_up(n, m):
    return ((n + m - 1) // m) * m


def rbf_kernel(x_ref, ct_ref, xn_ref, cn_ref, isig_ref, o_ref, acc_ref):
    """One (TM, TN) output tile; accumulates x @ c^T over the K (feature) axis."""
    k = pl.program_id(2)

    @pl.when(k == 0)
    def _():
        acc_ref[...] = jnp.zeros_like(acc_ref)

    # MXU matmul, f32 accumulation.
    acc_ref[...] += jnp.dot(x_ref[...], ct_ref[...],
                            preferred_element_type=jnp.float32)

    @pl.when(k == pl.num_programs(2) - 1)
    def _():
        # d2 = ||x||^2 + ||c||^2 - 2 x.c ; clamp tiny negative values from
        # cancellation before the gaussian.
        d2 = xn_ref[...] + cn_ref[...] - 2.0 * acc_ref[...]
        d2 = jnp.maximum(d2, 0.0)
        # (sqrt(d2)/sigma)^2 == d2 * exp(-2*log_sigma); one EUP exp per element.
        o_ref[...] = jnp.exp(-d2 * isig_ref[...]).astype(o_ref.dtype)


def rbf_forward(x, centres, log_sigmas, *, tm=256, tn=256, tk=512):
    """x: (B, F), centres: (O, F), log_sigmas: (O,) -> (B, O) float32."""
    B, F = x.shape
    O, _ = centres.shape

    # Pad to TPU-friendly sizes (lane-dense output, (8,128)-aligned blocks).
    B_pad = _round_up(B, 8)
    O_pad = _round_up(O, 128)
    F_pad = _round_up(F, 128)

    tm = min(tm, B_pad)
    tn = min(tn, O_pad)
    tk = min(tk, F_pad)

    B_pad = _round_up(B_pad, tm)
    O_pad = _round_up(O_pad, tn)
    F_pad = _round_up(F_pad, tk)

    xp = jnp.pad(x.astype(jnp.float32), ((0, B_pad - B), (0, F_pad - F)))
    cp = jnp.pad(centres.astype(jnp.float32), ((0, O_pad - O), (0, F_pad - F)))
    lsp = jnp.pad(log_sigmas.astype(jnp.float32), ((0, O_pad - O),))

    # Pre-transposed centres so the kernel matmul is (TM,TK) @ (TK,TN).
    ct = cp.T                                                   # (F_pad, O_pad)
    # Per-row / per-centre constants hoisted out of the K loop.
    x_norm2 = jnp.sum(xp * xp, axis=-1, keepdims=True)          # (B_pad, 1)
    c_norm2 = jnp.sum(cp * cp, axis=-1)[None, :]                # (1, O_pad)
    inv_sigma2 = jnp.exp(-2.0 * lsp)[None, :]                   # (1, O_pad)

    grid = (B_pad // tm, O_pad // tn, F_pad // tk)

    out_padded = pl.pallas_call(
        rbf_kernel,
        out_shape=jax.ShapeDtypeStruct((B_pad, O_pad), jnp.float32),
        grid_spec=pltpu.PrefetchScalarGridSpec(
            num_scalar_prefetch=0,
            grid=grid,
            in_specs=[
                pl.BlockSpec((tm, tk), lambda i, j, k: (i, k)),   # x tile
                pl.BlockSpec((tk, tn), lambda i, j, k: (k, j)),   # centres^T tile
                pl.BlockSpec((tm, 1), lambda i, j, k: (i, 0)),    # ||x||^2
                pl.BlockSpec((1, tn), lambda i, j, k: (0, j)),    # ||c||^2
                pl.BlockSpec((1, tn), lambda i, j, k: (0, j)),    # exp(-2 log_sigma)
            ],
            out_specs=pl.BlockSpec((tm, tn), lambda i, j, k: (i, j)),
            scratch_shapes=[pltpu.VMEM((tm, tn), jnp.float32)],
        ),
        compiler_params=pltpu.CompilerParams(
            dimension_semantics=("parallel", "parallel", "arbitrary"),
            vmem_limit_bytes=64 * 1024 * 1024,
        ),
        cost_estimate=pl.CostEstimate(
            flops=2 * B_pad * O_pad * F_pad,
            transcendentals=B_pad * O_pad,
            bytes_accessed=4 * (B_pad * F_pad + O_pad * F_pad + B_pad * O_pad),
        ),
    )(xp, ct, x_norm2, c_norm2, inv_sigma2)

    return out_padded[:B, :O]


def rbf_reference(x, centres, log_sigmas):
    """Pure-JAX reference mirroring the PyTorch forward exactly."""
    diff = x[:, None, :] - centres[None, :, :]
    d2 = jnp.sum(diff * diff, axis=-1)
    dist = jnp.sqrt(d2) / jnp.exp(log_sigmas)[None, :]
    return jnp.exp(-(dist * dist))


if __name__ == "__main__":
    key = jax.random.PRNGKey(0)
    k_x, k_c = jax.random.split(key)

    B, in_features, out_features = 8, 32, 64

    x = jax.random.normal(k_x, (B, in_features), dtype=jnp.float32)
    # nn.init.normal_(centres, 0, 1); nn.init.constant_(log_sigmas, 0)
    centres = jax.random.normal(k_c, (out_features, in_features), dtype=jnp.float32)
    log_sigmas = jnp.zeros((out_features,), dtype=jnp.float32)

    out = rbf_forward(x, centres, log_sigmas)
    out = jax.block_until_ready(out)

    ref = rbf_reference(x, centres, log_sigmas)
    assert out.shape == (B, out_features)
    assert jnp.allclose(out, ref, atol=1e-4, rtol=1e-4), "mismatch vs reference"

    print("KERNEL_OK")
</pallas_src>

<mosaic_0001>
module attributes {stable_mosaic.version = 11 : i64} {
  func.func @rbf_kernel(%arg0: i32, %arg1: i32, %arg2: i32, %arg3: memref<8x128xf32, #tpu.memory_space<vmem>>, %arg4: memref<128x128xf32, #tpu.memory_space<vmem>>, %arg5: memref<8x1xf32, #tpu.memory_space<vmem>>, %arg6: memref<1x128xf32, #tpu.memory_space<vmem>>, %arg7: memref<1x128xf32, #tpu.memory_space<vmem>>, %arg8: memref<8x128xf32, #tpu.memory_space<vmem>>, %arg9: memref<8x128xf32, #tpu.memory_space<vmem>>) attributes {dimension_semantics = [#tpu.dimension_semantics<parallel>, #tpu.dimension_semantics<parallel>, #tpu.dimension_semantics<arbitrary>], iteration_bounds = array<i64: 1, 1, 1>, scalar_prefetch = 0 : i64, scratch_operands = 1 : i64, tpu.core_type = #tpu.core_type<tc>, window_params = [{transform_indices = @transform_0, window_bounds = array<i64: 8, 128>}, {transform_indices = @transform_1, window_bounds = array<i64: 128, 128>}, {transform_indices = @transform_2, window_bounds = array<i64: 8, 1>}, {transform_indices = @transform_3, window_bounds = array<i64: 1, 128>}, {transform_indices = @transform_4, window_bounds = array<i64: 1, 128>}, {transform_indices = @transform_5, window_bounds = array<i64: 8, 128>}]} {
    %c0_i32 = arith.constant 0 : i32
    %0 = arith.cmpi eq, %arg2, %c0_i32 : i32
    %1 = arith.extui %0 : i1 to i32
    %c0_i32_0 = arith.constant 0 : i32
    %2 = arith.cmpi ne, %1, %c0_i32_0 : i32
    scf.if %2 {
      %cst_10 = arith.constant 0.000000e+00 : f32
      %12 = vector.broadcast %cst_10 : f32 to vector<8x128xf32>
      %c0_11 = arith.constant 0 : index
      %c0_12 = arith.constant 0 : index
      %13 = vector.load %arg9[%c0_11, %c0_12] : memref<8x128xf32, #tpu.memory_space<vmem>>, vector<8x128xf32>
      tpu.vector_store %arg9[%c0_11, %c0_12], %12 {strides = array<i32>} : memref<8x128xf32, #tpu.memory_space<vmem>>, vector<8x128xf32>,
    } else {
    }
    %c0 = arith.constant 0 : index
    %c0_1 = arith.constant 0 : index
    %3 = vector.load %arg9[%c0, %c0_1] : memref<8x128xf32, #tpu.memory_space<vmem>>, vector<8x128xf32>
    %c0_2 = arith.constant 0 : index
    %c0_3 = arith.constant 0 : index
    %4 = vector.load %arg3[%c0_2, %c0_3] : memref<8x128xf32, #tpu.memory_space<vmem>>, vector<8x128xf32>
    %c0_4 = arith.constant 0 : index
    %c0_5 = arith.constant 0 : index
    %5 = vector.load %arg4[%c0_4, %c0_5] : memref<128x128xf32, #tpu.memory_space<vmem>>, vector<128x128xf32>
    %cst = arith.constant dense<0.000000e+00> : vector<8x128xf32>
    %6 = tpu.matmul %4, %5, %cst {dimension_numbers = #tpu.dot_dimension_numbers<[1], [0], [0], [1], [0, 0, 1, 1], [], []>} : vector<8x128xf32>, vector<128x128xf32>, vector<8x128xf32> -> vector<8x128xf32>
    %7 = arith.addf %3, %6 : vector<8x128xf32>
    %c0_6 = arith.constant 0 : index
    %c0_7 = arith.constant 0 : index
    %8 = vector.load %arg9[%c0_6, %c0_7] : memref<8x128xf32, #tpu.memory_space<vmem>>, vector<8x128xf32>
    tpu.vector_store %arg9[%c0_6, %c0_7], %7 {strides = array<i32>} : memref<8x128xf32, #tpu.memory_space<vmem>>, vector<8x128xf32>,
    %c0_i32_8 = arith.constant 0 : i32
    %9 = arith.cmpi eq, %arg2, %c0_i32_8 : i32
    %10 = arith.extui %9 : i1 to i32
    %c0_i32_9 = arith.constant 0 : i32
    %11 = arith.cmpi ne, %10, %c0_i32_9 : i32
    scf.if %11 {
      %c0_10 = arith.constant 0 : index
      %c0_11 = arith.constant 0 : index
      %12 = vector.load %arg5[%c0_10, %c0_11] : memref<8x1xf32, #tpu.memory_space<vmem>>, vector<8x1xf32>
      %c0_12 = arith.constant 0 : index
      %c0_13 = arith.constant 0 : index
      %13 = vector.load %arg6[%c0_12, %c0_13] : memref<1x128xf32, #tpu.memory_space<vmem>>, vector<1x128xf32>
      %14 = vector.broadcast %12 : vector<8x1xf32> to vector<8x128xf32>
      %15 = vector.broadcast %13 : vector<1x128xf32> to vector<8x128xf32>
      %16 = arith.addf %14, %15 : vector<8x128xf32>
      %c0_14 = arith.constant 0 : index
      %c0_15 = arith.constant 0 : index
      %17 = vector.load %arg9[%c0_14, %c0_15] : memref<8x128xf32, #tpu.memory_space<vmem>>, vector<8x128xf32>
      %cst_16 = arith.constant 2.000000e+00 : f32
      %18 = vector.broadcast %cst_16 : f32 to vector<8x128xf32>
      %19 = arith.mulf %18, %17 : vector<8x128xf32>
      %20 = arith.subf %16, %19 : vector<8x128xf32>
      %cst_17 = arith.constant 0.000000e+00 : f32
      %21 = vector.broadcast %cst_17 : f32 to vector<8x128xf32>
      %22 = arith.maximumf %20, %21 : vector<8x128xf32>
      %cst_18 = arith.constant 0.000000e+00 : f32
      %23 = vector.broadcast %cst_18 : f32 to vector<8x128xf32>
      %24 = arith.subf %23, %22 : vector<8x128xf32>
      %c0_19 = arith.constant 0 : index
      %c0_20 = arith.constant 0 : index
      %25 = vector.load %arg7[%c0_19, %c0_20] : memref<1x128xf32, #tpu.memory_space<vmem>>, vector<1x128xf32>
      %26 = vector.broadcast %25 : vector<1x128xf32> to vector<8x128xf32>
      %27 = arith.mulf %24, %26 : vector<8x128xf32>
      %28 = math.exp %27 : vector<8x128xf32>
      %c0_21 = arith.constant 0 : index
      %c0_22 = arith.constant 0 : index
      %29 = vector.load %arg8[%c0_21, %c0_22] : memref<8x128xf32, #tpu.memory_space<vmem>>, vector<8x128xf32>
      tpu.vector_store %arg8[%c0_21, %c0_22], %28 {strides = array<i32>} : memref<8x128xf32, #tpu.memory_space<vmem>>, vector<8x128xf32>,
    } else {
    }
    return
  }
  func.func @transform_0(%arg0: i32, %arg1: i32, %arg2: i32) -> (i32, i32) {
    %c0_i32 = arith.constant 0 : i32
    return %arg0, %arg2 : i32, i32
  }
  func.func @transform_1(%arg0: i32, %arg1: i32, %arg2: i32) -> (i32, i32) {
    %c0_i32 = arith.constant 0 : i32
    return %arg2, %arg1 : i32, i32
  }
  func.func @transform_2(%arg0: i32, %arg1: i32, %arg2: i32) -> (i32, i32) {
    %c0_i32 = arith.constant 0 : i32
    %c0_i32_0 = arith.constant 0 : i32
    return %arg0, %c0_i32 : i32, i32
  }
  func.func @transform_3(%arg0: i32, %arg1: i32, %arg2: i32) -> (i32, i32) {
    %c0_i32 = arith.constant 0 : i32
    %c0_i32_0 = arith.constant 0 : i32
    return %c0_i32, %arg1 : i32, i32
  }
  func.func @transform_4(%arg0: i32, %arg1: i32, %arg2: i32) -> (i32, i32) {
    %c0_i32 = arith.constant 0 : i32
    %c0_i32_0 = arith.constant 0 : i32
    return %c0_i32, %arg1 : i32, i32
  }
  func.func @transform_5(%arg0: i32, %arg1: i32, %arg2: i32) -> (i32, i32) {
    %c0_i32 = arith.constant 0 : i32
    return %arg0, %arg1 : i32, i32
  }
}

</mosaic_0001>

<llo_original>
// kernel: tpu_custom_call.1
$region0: #{tpu_custom_call.1}
  #allocation0 [shape = 'u32[]', space=smem, size = 0x4, offset = 0x4, fixed_abs, tag = 'smem constant byte address 0x4 - core index']
  #allocation1 [shape = 'u32[144,128]{1,0:T(1,128)}', space=vmem, size = 0x12000, scoped, tag = 'internal scratch']
  #allocation2 [shape = 'f32[8,128]{1,0:T(8,128)}', space=vmem, size = 0x1000, scoped, tag = 'scratch operand']
  %s0 = inlined_call_operand.hbm [shape: f32[8,128], index: 0, kind: input, shape index: {}]
  %s1 = inlined_call_operand.hbm [shape: f32[128,128], index: 1, kind: input, shape index: {}]
  %s2 = inlined_call_operand.hbm [shape: f32[8,1], index: 2, kind: input, shape index: {}]
  %s3 = inlined_call_operand.hbm [shape: f32[1,128], index: 3, kind: input, shape index: {}]
  %s4 = inlined_call_operand.hbm [shape: f32[1,128], index: 4, kind: input, shape index: {}]
  %s5 = inlined_call_operand.hbm [shape: f32[8,128], index: 5, kind: output, shape index: {}]
  %s6 = sld [smem:[#allocation0]]
  $region58: #{tpu_custom_call.1} parent=0
    _
  %s8 = ssub.s32 1, %s6
  %s9 = scalar_select 0, %s8, %s6
  $region1: #{tpu_custom_call.1} parent=0
    #allocation3 [shape = 'u8[4096]{0}', space=vmem, size = 0x1000, scoped, tag = 'input window, operand 0, single buffered']
    #allocation4 [shape = 's32[1]{0}', space=sflag, size = 0x4, scoped, tag = 'scoped memory for tpu_custom_call.1']
    #allocation5 [shape = 's32[1]{0}', space=sflag, size = 0x4, scoped, tag = 'scoped memory for tpu_custom_call.1']
    #allocation6 [shape = 'u8[65536]{0}', space=vmem, size = 0x10000, scoped, tag = 'input window, operand 1, single buffered']
    #allocation7 [shape = 's32[1]{0}', space=sflag, size = 0x4, scoped, tag = 'scoped memory for tpu_custom_call.1']
    #allocation8 [shape = 'u8[4096]{0}', space=vmem, size = 0x1000, scoped, tag = 'input window, operand 2, single buffered']
    #allocation9 [shape = 'u8[512]{0}', space=vmem, size = 0x400, scoped, tag = 'input window, operand 3, single buffered']
    #allocation10 [shape = 's32[1]{0}', space=sflag, size = 0x4, scoped, tag = 'scoped memory for tpu_custom_call.1']
    #allocation11 [shape = 'u8[512]{0}', space=vmem, size = 0x400, scoped, tag = 'input window, operand 4, single buffered']
    #allocation12 [shape = 'u8[4096]{0}', space=vmem, size = 0x1000, scoped, tag = 'output window, operand 0, single buffered']
    %10 = vsyncpa [#allocation4], 0
    %11 = vsyncpa [#allocation7], 0
    %12 = vsyncpa [#allocation10], 0
    %13 = vsyncpa [#allocation5], 0
    // Predicated region
    $region2: #{tpu_custom_call.1} parent=1 // pred_check
      _
    $region3: #{tpu_custom_call.1} parent=1 // pred_check_branch
      %15 = sbr.rel (0) target = $region5
    $region4: #{tpu_custom_call.1} parent=1 // pred_region
      %s17 = ssub.s32 128, 128
      %18 = vsyncadd [#allocation4], %s17
      %s20 = sshll.u32 [#allocation3], 4
      %s21 = int_to_ptr.vmem [resolvable:$true] %s20
      %23 = dma.hbm_to_vmem [thread:$0]  %s0, 128, %s21, [#allocation4]
    $region5: #{tpu_custom_call.1} parent=1 // pred_fallthru
      _
    // Predicated region
    $region6: #{tpu_custom_call.1} parent=1 // pred_check
      _
    $region7: #{tpu_custom_call.1} parent=1 // pred_check_branch
      %25 = sbr.rel (0) target = $region9
    $region8: #{tpu_custom_call.1} parent=1 // pred_region
      %s27 = ssub.s32 2048, 2048
      %28 = vsyncadd [#allocation7], %s27
      %s29 = sshll.u32 [#allocation6], 4
      %s30 = int_to_ptr.vmem [resolvable:$true] %s29
      %35 = dma.hbm_to_vmem [thread:$0]  %s1, 2048, %s30, [#allocation7], 128, 128, 8
    $region9: #{tpu_custom_call.1} parent=1 // pred_fallthru
      _
    // Predicated region
    $region10: #{tpu_custom_call.1} parent=1 // pred_check
      _
    $region11: #{tpu_custom_call.1} parent=1 // pred_check_branch
      %37 = sbr.rel (0) target = $region13
    $region12: #{tpu_custom_call.1} parent=1 // pred_region
      %s39 = ssub.s32 128, 128
      %40 = vsyncadd [#allocation7], %s39
      %s42 = sshll.u32 [#allocation8], 4
      %s43 = int_to_ptr.vmem [resolvable:$true] %s42
      %45 = dma.hbm_to_vmem [thread:$0]  %s2, 128, %s43, [#allocation7]
    $region13: #{tpu_custom_call.1} parent=1 // pred_fallthru
      _
    // Predicated region
    $region14: #{tpu_custom_call.1} parent=1 // pred_check
      _
    $region15: #{tpu_custom_call.1} parent=1 // pred_check_branch
      %47 = sbr.rel (0) target = $region17
    $region16: #{tpu_custom_call.1} parent=1 // pred_region
      %s49 = ssub.s32 16, 16
      %50 = vsyncadd [#allocation10], %s49
      %s52 = sshll.u32 [#allocation9], 4
      %s53 = int_to_ptr.vmem [resolvable:$true] %s52
      %55 = dma.hbm_to_vmem [thread:$0]  %s3, 16, %s53, [#allocation10]
    $region17: #{tpu_custom_call.1} parent=1 // pred_fallthru
      _
    // Predicated region
    $region18: #{tpu_custom_call.1} parent=1 // pred_check
      _
    $region19: #{tpu_custom_call.1} parent=1 // pred_check_branch
      %57 = sbr.rel (0) target = $region21
    $region20: #{tpu_custom_call.1} parent=1 // pred_region
      %s59 = ssub.s32 16, 16
      %60 = vsyncadd [#allocation10], %s59
      %s62 = sshll.u32 [#allocation11], 4
      %s63 = int_to_ptr.vmem [resolvable:$true] %s62
      %65 = dma.hbm_to_vmem [thread:$0]  %s4, 16, %s63, [#allocation10]
    $region21: #{tpu_custom_call.1} parent=1 // pred_fallthru
      _
    // Predicated region
    $region22: #{tpu_custom_call.1} parent=1 // pred_check
      _
    $region23: #{tpu_custom_call.1} parent=1 // pred_check_branch
      %67 = sbr.rel (0) target = $region25
    $region24: #{tpu_custom_call.1} parent=1 // pred_region
      %68 = dma.done [#allocation4], 128
    $region25: #{tpu_custom_call.1} parent=1 // pred_fallthru
      _
    // Predicated region
    $region26: #{tpu_custom_call.1} parent=1 // pred_check
      _
    $region27: #{tpu_custom_call.1} parent=1 // pred_check_branch
      %70 = sbr.rel (0) target = $region29
    $region28: #{tpu_custom_call.1} parent=1 // pred_region
      %71 = dma.done [#allocation7], 2048
    $region29: #{tpu_custom_call.1} parent=1 // pred_fallthru
      _
    // Predicated region
    $region30: #{tpu_custom_call.1} parent=1 // pred_check
      _
    $region31: #{tpu_custom_call.1} parent=1 // pred_check_branch
      %73 = sbr.rel (0) target = $region33
    $region32: #{tpu_custom_call.1} parent=1 // pred_region
      %74 = dma.done [#allocation7], 128
    $region33: #{tpu_custom_call.1} parent=1 // pred_fallthru
      _
    // Predicated region
    $region34: #{tpu_custom_call.1} parent=1 // pred_check
      _
    $region35: #{tpu_custom_call.1} parent=1 // pred_check_branch
      %76 = sbr.rel (0) target = $region37
    $region36: #{tpu_custom_call.1} parent=1 // pred_region
      %77 = dma.done [#allocation10], 16
    $region37: #{tpu_custom_call.1} parent=1 // pred_fallthru
      _
    // Predicated region
    $region38: #{tpu_custom_call.1} parent=1 // pred_check
      _
    $region39: #{tpu_custom_call.1} parent=1 // pred_check_branch
      %79 = sbr.rel (0) target = $region41
    $region40: #{tpu_custom_call.1} parent=1 // pred_region
      %80 = dma.done [#allocation10], 16
    $region41: #{tpu_custom_call.1} parent=1 // pred_fallthru
      _
    %p81 = scmp.eq.s32.totalorder 0, 0
    // Predicated region
    $region42: #{tpu_custom_call.1} parent=1 // pred_check
      %p82 = pneg %p81
    $region43: #{tpu_custom_call.1} parent=1 // pred_check_branch
      %84 = sbr.rel (%p82) target = $region45
    $region44: #{tpu_custom_call.1} parent=1 // pred_region
      %85 = vst [vmem:[#allocation2] sm:$0xff] 0.0
    $region45: #{tpu_custom_call.1} parent=1 // pred_fallthru
      _
    %v86 = vld [vmem:[#allocation2] sm:$0xff]
    %v87 = vld [vmem:[#allocation3] sm:$0xff]
    %v88 = vld [vmem:[#allocation6] sm:$0xff]
    %v89 = vld [vmem:[#allocation6 + $0x8] sm:$0xff]
    %v90 = vld [vmem:[#allocation6 + $0x10] sm:$0xff]
    %v91 = vld [vmem:[#allocation6 + $0x18] sm:$0xff]
    %v92 = vld [vmem:[#allocation6 + $0x20] sm:$0xff]
    %v93 = vld [vmem:[#allocation6 + $0x28] sm:$0xff]
    %v94 = vld [vmem:[#allocation6 + $0x30] sm:$0xff]
    %v95 = vld [vmem:[#allocation6 + $0x38] sm:$0xff]
    %v96 = vld [vmem:[#allocation6 + $0x40] sm:$0xff]
    %v97 = vld [vmem:[#allocation6 + $0x48] sm:$0xff]
    %v98 = vld [vmem:[#allocation6 + $0x50] sm:$0xff]
    %v99 = vld [vmem:[#allocation6 + $0x58] sm:$0xff]
    %v100 = vld [vmem:[#allocation6 + $0x60] sm:$0xff]
    %v101 = vld [vmem:[#allocation6 + $0x68] sm:$0xff]
    %v102 = vld [vmem:[#allocation6 + $0x70] sm:$0xff]
    %v103 = vld [vmem:[#allocation6 + $0x78] sm:$0xff]
    %104 = vmatprep.subr.mxu0 0.0
    %105 = vmatpush1.msra.mxu0 %v88
    %106 = vmatprep.subr.mxu0 0.0
    %107 = vmatpush1.msra.mxu0 %v89
    %108 = vmatprep.subr.mxu0 0.0
    %109 = vmatpush1.msra.mxu0 %v90
    %110 = vmatprep.subr.mxu0 0.0
    %111 = vmatpush1.msra.mxu0 %v91
    %112 = vmatprep.subr.mxu0 0.0
    %113 = vmatpush1.msra.mxu0 %v92
    %114 = vmatprep.subr.mxu0 0.0
    %115 = vmatpush1.msra.mxu0 %v93
    %116 = vmatprep.subr.mxu0 0.0
    %117 = vmatpush1.msra.mxu0 %v94
    %118 = vmatprep.subr.mxu0 0.0
    %119 = vmatpush1.msra.mxu0 %v95
    %120 = vmatprep.subr.mxu0 0.0
    %121 = vmatpush1.msra.mxu0 %v96
    %122 = vmatprep.subr.mxu0 0.0
    %123 = vmatpush1.msra.mxu0 %v97
    %124 = vmatprep.subr.mxu0 0.0
    %125 = vmatpush1.msra.mxu0 %v98
    %126 = vmatprep.subr.mxu0 0.0
    %127 = vmatpush1.msra.mxu0 %v99
    %128 = vmatprep.subr.mxu0 0.0
    %129 = vmatpush1.msra.mxu0 %v100
    %130 = vmatprep.subr.mxu0 0.0
    %131 = vmatpush1.msra.mxu0 %v101
    %132 = vmatprep.subr.mxu0 0.0
    %133 = vmatpush1.msra.mxu0 %v102
    %134 = vmatprep.subr.mxu0 0.0
    %135 = vmatpush1.msra.mxu0 %v103
    %136 = vmatprep.subr.mxu0 0.0
    %137 = vmatpush1.msra.mxu0 0.0
    %138 = vmatprep.subr.mxu0 0.0
    %139 = vmatpush1.msra.mxu0 0.0
    %140 = vmatprep.subr.mxu0 0.0
    %141 = vmatpush1.msra.mxu0 0.0
    %142 = vmatprep.subr.mxu0 0.0
    %143 = vmatpush1.msra.mxu0 0.0
    %144 = vmatprep.subr.mxu0 0.0
    %145 = vmatpush1.msra.mxu0 0.0
    %146 = vmatprep.subr.mxu0 0.0
    %147 = vmatpush1.msra.mxu0 0.0
    %148 = vmatprep.subr.mxu0 0.0
    %149 = vmatpush1.msra.mxu0 0.0
    %150 = vmatprep.subr.mxu0 0.0
    %151 = vmatpush1.msra.mxu0 0.0
    %152 = vmatprep.subr.mxu0 0.0
    %153 = vmatpush1.msra.mxu0 0.0
    %154 = vmatprep.subr.mxu0 0.0
    %155 = vmatpush1.msra.mxu0 0.0
    %156 = vmatprep.subr.mxu0 0.0
    %157 = vmatpush1.msra.mxu0 0.0
    %158 = vmatprep.subr.mxu0 0.0
    %159 = vmatpush1.msra.mxu0 0.0
    %160 = vmatprep.subr.mxu0 0.0
    %161 = vmatpush1.msra.mxu0 0.0
    %162 = vmatprep.subr.mxu0 0.0
    %163 = vmatpush1.msra.mxu0 0.0
    %164 = vmatprep.subr.mxu0 0.0
    %165 = vmatpush1.msra.mxu0 0.0
    %166 = vmatprep.subr.mxu0 0.0
    %167 = vmatpush1.msra.mxu0 0.0
    %168 = vmatprep.mubr.f32.mxu0 0.0
    %169 = vmatmul.mubr.f32.gmra.mrb[0].mxu0 %v87
    %v170 = vpop.f32.mrb[0].mxu0
    %v171 = vadd.f32 0.0, %v170
    %v172 = vpop.f32.mrb[0].mxu0
    %173 = vdwg.mxu0
    %v174 = vadd.f32 %v86, %v171
    %175 = vst [vmem:[#allocation2] sm:$0xff] %v174
    // Predicated region
    $region46: #{tpu_custom_call.1} parent=1 // pred_check
      %p176 = pneg %p81
    $region47: #{tpu_custom_call.1} parent=1 // pred_check_branch
      %178 = sbr.rel (%p176) target = $region49
    $region48: #{tpu_custom_call.1} parent=1 // pred_region
      %v179 = vld [vmem:[#allocation8] sm:$0xff]
      %v180 = vld [vmem:[#allocation9] sm:$0x1]
      %182 = vset.pattern.permute.xlu0 0
      %183 = vperm.xlu0 %182, %v179
      %v184 = vpop.permute.xlu0 %183
      %v187 = vlaneseq
      %v188 = vshrl.u32 %v187, 7
      %v189 = vsub.s32 0, %v188
      %v190 = vrot.slane %v180, %v189
      %v192 = vadd.f32 %v184, %v190
      %v193 = vld [vmem:[#allocation2] sm:$0xff]
      %v194 = vmul.f32 %v193, 2.0
      %v195 = vsub.f32 %v192, %v194
      %v196 = vmax.f32 %v195, 0.0
      %v197 = vsub.f32 0.0, %v196
      %v198 = vld [vmem:[#allocation11] sm:$0x1]
      %v200 = vlaneseq
      %v201 = vshrl.u32 %v200, 7
      %v202 = vsub.s32 0, %v201
      %v203 = vrot.slane %v198, %v202
      %v205 = vmul.f32 %v197, %v203
      %v206 = vmul.f32 %v205, 1.442695
      %v207 = vpow.pop %v206
      %208 = vst [vmem:[#allocation12] sm:$0xff] %v207
    $region49: #{tpu_custom_call.1} parent=1 // pred_fallthru
      _
    // Predicated region
    $region50: #{tpu_custom_call.1} parent=1 // pred_check
      _
    $region51: #{tpu_custom_call.1} parent=1 // pred_check_branch
      %210 = sbr.rel (0) target = $region53
    $region52: #{tpu_custom_call.1} parent=1 // pred_region
      %s212 = ssub.s32 128, 128
      %213 = vsyncadd [#allocation5], %s212
      %s215 = sshll.u32 [#allocation12], 4
      %s216 = int_to_ptr.vmem [resolvable:$true] %s215
      %218 = dma.vmem_to_hbm [thread:$0]  %s216, 128, %s5, [#allocation5]
    $region53: #{tpu_custom_call.1} parent=1 // pred_fallthru
      _
    // Predicated region
    $region54: #{tpu_custom_call.1} parent=1 // pred_check
      _
    $region55: #{tpu_custom_call.1} parent=1 // pred_check_branch
      %220 = sbr.rel (0) target = $region57
    $region56: #{tpu_custom_call.1} parent=1 // pred_region
      %221 = dma.done [#allocation5], 128
    $region57: #{tpu_custom_call.1} parent=1 // pred_fallthru
      _
    %222 = vsyncpa [#allocation4], 1
    %223 = vsyncpa [#allocation7], 1
    %224 = vsyncpa [#allocation10], 1
    %225 = vsyncpa [#allocation5], 1

</llo_original>
